<compile_context>
chip_gen: v5e
topology: v5e:2x2
jax: 0.10.0
libtpu: 0.0.40
codegen_flags: <defaults>
</compile_context>

<pallas_src>
import functools

import jax
import jax.numpy as jnp
from jax.experimental import pallas as pl
from jax.experimental.pallas import tpu as pltpu


# ---------------------------------------------------------------------------
# Helpers
# ---------------------------------------------------------------------------
def _vmem_budget_bytes():
    """~70% of this generation's VMEM (falls back to a v7x-safe value)."""
    try:
        cap = int(pltpu.get_tpu_info().vmem_capacity_bytes)
        if cap <= 0:
            raise ValueError
    except Exception:
        cap = 64 * 1024 * 1024
    return int(cap * 0.7)


def _choose_tile(n_rows, n_cols, vmem_budget, streamed_bufs,
                 target_block_bytes=8 << 20, max_rows=None):
    """Rows per grid step: multi-MiB blocks, bounded by the VMEM budget."""
    row_bytes = n_cols * 4
    headroom = 2 << 20
    budget_rows = max(8, (vmem_budget - headroom) // (streamed_bufs * row_bytes))
    target_rows = max(8, target_block_bytes // row_bytes)
    tile = min(budget_rows, target_rows)
    if max_rows is not None:
        tile = min(tile, max(8, max_rows))
    tile = max(8, (tile // 8) * 8)          # sublane-aligned
    if tile >= n_rows:
        return int(n_rows)                  # single full block (always legal)
    return int(tile)


# ---------------------------------------------------------------------------
# Kernel 1: streamed shifted sufficient statistics (per-chunk partials)
# ---------------------------------------------------------------------------
def _stats_kernel(x_ref, pivot_ref, s1_ref, s2_ref,
                  *, tile, n_rows, tiles_per_chunk, need_mask):
    c = pl.program_id(0)   # chunk (parallel -> megacore on v7x)
    t = pl.program_id(1)   # tile within chunk (arbitrary / reduction)

    @pl.when(t == 0)
    def _init():
        s1_ref[...] = jnp.zeros_like(s1_ref)
        s2_ref[...] = jnp.zeros_like(s2_ref)

    xc = x_ref[...].astype(jnp.float32) - pivot_ref[...]      # (tile, C)

    if need_mask:
        # Logical rows covered by this grid step; rows >= N (partial last
        # tile, or clamped duplicate tiles of the last chunk) contribute 0.
        start = (c * tiles_per_chunk + t) * tile
        rows = start + jax.lax.broadcasted_iota(jnp.int32, (tile, 1), 0)
        xc = jnp.where(rows < n_rows, xc, 0.0)

    s1_ref[...] += jnp.sum(xc, axis=0, keepdims=True)
    s2_ref[...] += jnp.sum(xc * xc, axis=0, keepdims=True)


# ---------------------------------------------------------------------------
# Kernel 2: streamed elementwise apply  o = x * scale + shift
# ---------------------------------------------------------------------------
def _apply_kernel(x_ref, scale_ref, shift_ref, o_ref):
    o_ref[...] = (
        x_ref[...].astype(jnp.float32) * scale_ref[...] + shift_ref[...]
    ).astype(o_ref.dtype)


# ---------------------------------------------------------------------------
# Tiny MLPs + fused per-feature scale/shift (plain XLA, per review)
# ---------------------------------------------------------------------------
def _finalize_scale_shift(s1_parts, s2_parts, pivot, n_rows, p, eps):
    s1 = jnp.sum(s1_parts, axis=0, keepdims=True)             # (1, C)
    s2 = jnp.sum(s2_parts, axis=0, keepdims=True)             # (1, C)
    n = jnp.float32(n_rows)

    x_mean = pivot + s1 / n
    var = jnp.maximum(s2 - s1 * s1 / n, 0.0) / (n - 1.0)      # unbiased (N-1)
    x_std = jnp.sqrt(var) + eps

    # TODO(synk): nn.Dropout(p=0.3) on x_mean / x_std is identity (eval mode).
    relu = lambda v: jnp.maximum(v, 0.0)
    ms = jnp.concatenate([x_mean, x_std], axis=0)             # (2, C)

    # --- standardization path ---
    h = relu(ms @ p["w_se"] + p["b_se"])                      # (2, Ms)
    x_standard_mean = h[0:1] @ p["w_smd"] + p["b_smd"]
    x_standard_std = relu(h[1:2] @ p["w_ssd"] + p["b_ssd"])

    # --- rescaling path ---
    r = relu(ms @ p["w_re"] + p["b_re"])                      # (2, Mr)
    beta_hat = jnp.tanh(r[0:1] @ p["w_rbd"] + p["b_rbd"])
    gamma_hat = jax.nn.sigmoid(r[1:2] @ p["w_rgd"] + p["b_rgd"])

    lam = p["lambdas"]
    mean = lam[0] * x_standard_mean + (1.0 - lam[0]) * x_mean
    std = lam[1] * x_standard_std + (1.0 - lam[1]) * x_std
    beta = lam[2] * beta_hat + p["bias_beta"]
    gamma = lam[3] * gamma_hat + p["bias_gamma"]

    scale = gamma / std
    shift = beta - mean * scale
    return scale.astype(jnp.float32), shift.astype(jnp.float32)


# ---------------------------------------------------------------------------
# Wrapper
# ---------------------------------------------------------------------------
def asr_norm_bn1d(x, params, *, eps=1e-6, max_tile_rows=None):
    """x: (N, C). params: PyTorch-equivalent parameters (Linear weights already
    transposed to (in_features, out_features))."""
    N, C = x.shape
    budget = _vmem_budget_bytes()

    # ---- pass 1: shifted sufficient statistics ------------------------------
    tile_s = _choose_tile(N, C, budget, streamed_bufs=2, max_rows=max_tile_rows)
    tiles_total = pl.cdiv(N, tile_s)
    num_chunks = 2 if tiles_total >= 2 else 1       # 2 -> megacore split on v7x
    tpc = pl.cdiv(tiles_total, num_chunks)
    need_mask = (num_chunks * tpc * tile_s != N)

    pivot = x[0:1].astype(jnp.float32)              # (1, C) numerical pivot

    def x_stats_map(c, t):
        # Clamp duplicated trailing steps onto the last real tile; the in-kernel
        # row mask zeroes their contribution.
        return (jnp.minimum(c * tpc + t, tiles_total - 1), 0)

    def chunk_row_map(c, t):
        return (c, 0)

    s1_parts, s2_parts = pl.pallas_call(
        functools.partial(_stats_kernel, tile=tile_s, n_rows=N,
                          tiles_per_chunk=tpc, need_mask=need_mask),
        out_shape=(jax.ShapeDtypeStruct((num_chunks, C), jnp.float32),
                   jax.ShapeDtypeStruct((num_chunks, C), jnp.float32)),
        grid=(num_chunks, tpc),
        in_specs=[pl.BlockSpec((tile_s, C), x_stats_map),
                  pl.BlockSpec((1, C), lambda c, t: (0, 0))],
        out_specs=(pl.BlockSpec((1, C), chunk_row_map),
                   pl.BlockSpec((1, C), chunk_row_map)),
        compiler_params=pltpu.CompilerParams(
            dimension_semantics=("parallel", "arbitrary"),
            vmem_limit_bytes=budget),
    )(x, pivot)

    # ---- tiny MLPs + fused scale/shift (XLA, weights never enter VMEM) ------
    scale, shift = _finalize_scale_shift(s1_parts, s2_parts, pivot, N, params, eps)

    # ---- pass 2: streamed elementwise apply ----------------------------------
    tile_a = _choose_tile(N, C, budget, streamed_bufs=4, max_rows=max_tile_rows)
    out = pl.pallas_call(
        _apply_kernel,
        out_shape=jax.ShapeDtypeStruct((N, C), x.dtype),
        grid=(pl.cdiv(N, tile_a),),
        in_specs=[pl.BlockSpec((tile_a, C), lambda i: (i, 0)),
                  pl.BlockSpec((1, C), lambda i: (0, 0)),
                  pl.BlockSpec((1, C), lambda i: (0, 0))],
        out_specs=pl.BlockSpec((tile_a, C), lambda i: (i, 0)),
        compiler_params=pltpu.CompilerParams(
            dimension_semantics=("parallel",),
            vmem_limit_bytes=budget),
    )(x, scale, shift)
    return out


# ---------------------------------------------------------------------------
# Parameter init (shapes match ASRNormBN1d.__init__) + pure-JAX reference
# ---------------------------------------------------------------------------
def init_params(key, C):
    stan_mid = C // 2
    rsc_mid = C // 16
    ks = jax.random.split(key, 12)

    def lin(kw, kb, fan_in, fan_out):
        bound = 1.0 / jnp.sqrt(fan_in)
        w = jax.random.uniform(kw, (fan_in, fan_out), jnp.float32, -bound, bound)
        b = jax.random.uniform(kb, (1, fan_out), jnp.float32, -bound, bound)
        return w, b

    w_se, b_se = lin(ks[0], ks[1], C, stan_mid)
    w_smd, b_smd = lin(ks[2], ks[3], stan_mid, C)
    w_ssd, b_ssd = lin(ks[4], ks[5], stan_mid, C)
    w_re, b_re = lin(ks[6], ks[7], C, rsc_mid)
    w_rbd, b_rbd = lin(ks[8], ks[9], rsc_mid, C)
    w_rgd, b_rgd = lin(ks[10], ks[11], rsc_mid, C)

    sig = lambda v: 1.0 / (1.0 + jnp.exp(-jnp.float32(v)))
    lambdas = jnp.array([sig(-3.0), sig(-3.0), sig(-5.0), sig(-5.0)], dtype=jnp.float32)

    return dict(
        w_se=w_se, b_se=b_se,
        w_smd=w_smd, b_smd=b_smd,
        w_ssd=w_ssd, b_ssd=b_ssd,
        w_re=w_re, b_re=b_re,
        w_rbd=w_rbd, b_rbd=b_rbd,
        w_rgd=w_rgd, b_rgd=b_rgd,
        lambdas=lambdas,
        bias_beta=jnp.zeros((1, C), jnp.float32),
        bias_gamma=jnp.ones((1, C), jnp.float32),
    )


def asr_norm_bn1d_ref(x, p, eps=1e-6):
    """Pure-JAX reference mirroring the PyTorch forward (eval-mode dropout)."""
    N, C = x.shape
    x_mean = jnp.mean(x, axis=0, keepdims=True)
    var = jnp.sum((x - x_mean) ** 2, axis=0, keepdims=True) / (N - 1)
    x_std = jnp.sqrt(var) + eps

    relu = lambda v: jnp.maximum(v, 0.0)
    h_mu = x_mean @ p["w_se"] + p["b_se"]
    xsm = relu(h_mu) @ p["w_smd"] + p["b_smd"]
    h_sd = x_std @ p["w_se"] + p["b_se"]
    xss = relu(relu(h_sd) @ p["w_ssd"] + p["b_ssd"])

    lam = p["lambdas"]
    mean = lam[0] * xsm + (1 - lam[0]) * x_mean
    std = lam[1] * xss + (1 - lam[1]) * x_std
    xn = (x - mean) / std

    r_mu = x_mean @ p["w_re"] + p["b_re"]
    beta_hat = jnp.tanh(relu(r_mu) @ p["w_rbd"] + p["b_rbd"])
    r_sd = x_std @ p["w_re"] + p["b_re"]
    gamma_hat = jax.nn.sigmoid(relu(r_sd) @ p["w_rgd"] + p["b_rgd"])

    beta = lam[2] * beta_hat + p["bias_beta"]
    gamma = lam[3] * gamma_hat + p["bias_gamma"]
    return xn * gamma + beta


if __name__ == "__main__":
    key = jax.random.PRNGKey(0)
    kx, kp, kx2 = jax.random.split(key, 3)

    # Test 1: small natural shapes (dim=32 -> stan_mid=16, rsc_mid=2).
    N, C = 8, 32
    x = jax.random.normal(kx, (N, C), jnp.float32)
    params = init_params(kp, C)
    out = jax.block_until_ready(asr_norm_bn1d(x, params))
    ref = asr_norm_bn1d_ref(x, params)
    assert out.shape == (N, C)
    assert jnp.allclose(out, ref, atol=1e-4, rtol=1e-4), "mismatch vs reference (test 1)"

    # Test 2: forced small tiles -> multi-tile grid, 2-chunk stats split, and
    # a masked partial last tile (exercises the no-padding code paths).
    N2 = 300
    x2 = jax.random.normal(kx2, (N2, C), jnp.float32)
    out2 = jax.block_until_ready(asr_norm_bn1d(x2, params, max_tile_rows=64))
    ref2 = asr_norm_bn1d_ref(x2, params)
    assert out2.shape == (N2, C)
    assert jnp.allclose(out2, ref2, atol=1e-4, rtol=1e-4), "mismatch vs reference (test 2)"

    print("KERNEL_OK")
</pallas_src>

<mosaic_0001>
module attributes {stable_mosaic.version = 11 : i64} {
  func.func @_stats_kernel(%arg0: i32, %arg1: i32, %arg2: memref<8x32xf32, #tpu.memory_space<vmem>>, %arg3: memref<1x32xf32, #tpu.memory_space<vmem>>, %arg4: memref<1x32xf32, #tpu.memory_space<vmem>>, %arg5: memref<1x32xf32, #tpu.memory_space<vmem>>) attributes {dimension_semantics = [#tpu.dimension_semantics<parallel>, #tpu.dimension_semantics<arbitrary>], iteration_bounds = array<i64: 1, 1>, scalar_prefetch = 0 : i64, scratch_operands = 0 : i64, tpu.core_type = #tpu.core_type<tc>, window_params = [{transform_indices = @transform_0, window_bounds = array<i64: 8, 32>}, {pipeline_mode = #tpu.pipeline_mode<synchronous>, transform_indices = @transform_1, window_bounds = array<i64: 1, 32>}, {transform_indices = @transform_2, window_bounds = array<i64: 1, 32>}, {transform_indices = @transform_3, window_bounds = array<i64: 1, 32>}]} {
    %c0_i32 = arith.constant 0 : i32
    %0 = arith.cmpi eq, %arg1, %c0_i32 : i32
    %1 = arith.extui %0 : i1 to i32
    %c0_i32_0 = arith.constant 0 : i32
    %2 = arith.cmpi ne, %1, %c0_i32_0 : i32
    scf.if %2 {
      %cst_13 = arith.constant 0.000000e+00 : f32
      %18 = vector.broadcast %cst_13 : f32 to vector<1x32xf32>
      %c0_14 = arith.constant 0 : index
      %c0_15 = arith.constant 0 : index
      %19 = vector.load %arg4[%c0_14, %c0_15] : memref<1x32xf32, #tpu.memory_space<vmem>>, vector<1x32xf32>
      tpu.vector_store %arg4[%c0_14, %c0_15], %18 {strides = array<i32>} : memref<1x32xf32, #tpu.memory_space<vmem>>, vector<1x32xf32>,
      %cst_16 = arith.constant 0.000000e+00 : f32
      %20 = vector.broadcast %cst_16 : f32 to vector<1x32xf32>
      %c0_17 = arith.constant 0 : index
      %c0_18 = arith.constant 0 : index
      %21 = vector.load %arg5[%c0_17, %c0_18] : memref<1x32xf32, #tpu.memory_space<vmem>>, vector<1x32xf32>
      tpu.vector_store %arg5[%c0_17, %c0_18], %20 {strides = array<i32>} : memref<1x32xf32, #tpu.memory_space<vmem>>, vector<1x32xf32>,
    } else {
    }
    %c0 = arith.constant 0 : index
    %c0_1 = arith.constant 0 : index
    %3 = vector.load %arg2[%c0, %c0_1] : memref<8x32xf32, #tpu.memory_space<vmem>>, vector<8x32xf32>
    %c0_2 = arith.constant 0 : index
    %c0_3 = arith.constant 0 : index
    %4 = vector.load %arg3[%c0_2, %c0_3] : memref<1x32xf32, #tpu.memory_space<vmem>>, vector<1x32xf32>
    %5 = vector.broadcast %4 : vector<1x32xf32> to vector<8x32xf32>
    %6 = arith.subf %3, %5 : vector<8x32xf32>
    %c0_4 = arith.constant 0 : index
    %c0_5 = arith.constant 0 : index
    %7 = vector.load %arg4[%c0_4, %c0_5] : memref<1x32xf32, #tpu.memory_space<vmem>>, vector<1x32xf32>
    %cst = arith.constant dense<0.000000e+00> : vector<32xf32>
    %8 = vector.multi_reduction <add>, %6, %cst [0] : vector<8x32xf32> to vector<32xf32>
    %9 = vector.shape_cast %8 : vector<32xf32> to vector<1x32xf32>
    %10 = arith.addf %7, %9 : vector<1x32xf32>
    %c0_6 = arith.constant 0 : index
    %c0_7 = arith.constant 0 : index
    %11 = vector.load %arg4[%c0_6, %c0_7] : memref<1x32xf32, #tpu.memory_space<vmem>>, vector<1x32xf32>
    tpu.vector_store %arg4[%c0_6, %c0_7], %10 {strides = array<i32>} : memref<1x32xf32, #tpu.memory_space<vmem>>, vector<1x32xf32>,
    %c0_8 = arith.constant 0 : index
    %c0_9 = arith.constant 0 : index
    %12 = vector.load %arg5[%c0_8, %c0_9] : memref<1x32xf32, #tpu.memory_space<vmem>>, vector<1x32xf32>
    %13 = arith.mulf %6, %6 : vector<8x32xf32>
    %cst_10 = arith.constant dense<0.000000e+00> : vector<32xf32>
    %14 = vector.multi_reduction <add>, %13, %cst_10 [0] : vector<8x32xf32> to vector<32xf32>
    %15 = vector.shape_cast %14 : vector<32xf32> to vector<1x32xf32>
    %16 = arith.addf %12, %15 : vector<1x32xf32>
    %c0_11 = arith.constant 0 : index
    %c0_12 = arith.constant 0 : index
    %17 = vector.load %arg5[%c0_11, %c0_12] : memref<1x32xf32, #tpu.memory_space<vmem>>, vector<1x32xf32>
    tpu.vector_store %arg5[%c0_11, %c0_12], %16 {strides = array<i32>} : memref<1x32xf32, #tpu.memory_space<vmem>>, vector<1x32xf32>,
    return
  }
  func.func @transform_0(%arg0: i32, %arg1: i32) -> (i32, i32) {
    %c1_i32 = arith.constant 1 : i32
    %0 = arith.muli %arg0, %c1_i32 : i32
    %1 = arith.addi %0, %arg1 : i32
    %c0_i32 = arith.constant 0 : i32
    %2 = arith.minsi %1, %c0_i32 : i32
    %c0_i32_0 = arith.constant 0 : i32
    %c0_i32_1 = arith.constant 0 : i32
    return %2, %c0_i32_0 : i32, i32
  }
  func.func @transform_1(%arg0: i32, %arg1: i32) -> (i32, i32) {
    %c0_i32 = arith.constant 0 : i32
    %c0_i32_0 = arith.constant 0 : i32
    %c0_i32_1 = arith.constant 0 : i32
    return %c0_i32, %c0_i32_0 : i32, i32
  }
  func.func @transform_2(%arg0: i32, %arg1: i32) -> (i32, i32) {
    %c0_i32 = arith.constant 0 : i32
    %c0_i32_0 = arith.constant 0 : i32
    return %arg0, %c0_i32 : i32, i32
  }
  func.func @transform_3(%arg0: i32, %arg1: i32) -> (i32, i32) {
    %c0_i32 = arith.constant 0 : i32
    %c0_i32_0 = arith.constant 0 : i32
    return %arg0, %c0_i32 : i32, i32
  }
}

</mosaic_0001>

<llo_original>
// kernel: tpu_custom_call.1
$region0: #{tpu_custom_call.1}
  #allocation0 [shape = 'u32[]', space=smem, size = 0x4, offset = 0x4, fixed_abs, tag = 'smem constant byte address 0x4 - core index']
  #allocation1 [shape = 'u32[72,128]{1,0:T(1,128)}', space=vmem, size = 0x9000, scoped, tag = 'internal scratch']
  %s0 = inlined_call_operand.hbm [shape: f32[8,32], index: 0, kind: input, shape index: {}]
  %s1 = inlined_call_operand.hbm [shape: f32[1,32], index: 1, kind: input, shape index: {}]
  %s2 = inlined_call_operand.hbm [shape: f32[1,32], index: 2, kind: output, shape index: {0}]
  %s3 = inlined_call_operand.hbm [shape: f32[1,32], index: 3, kind: output, shape index: {1}]
  %4 = xla_tuple %s2, %s3
  %s5 = sld [smem:[#allocation0]]
  $region38: #{tpu_custom_call.1} parent=0
    _
  %s7 = ssub.s32 1, %s5
  %s8 = scalar_select 0, %s7, %s5
  $region1: #{tpu_custom_call.1} parent=0
    #allocation2 [shape = 'u8[4096]{0}', space=vmem, size = 0x1000, scoped, tag = 'input window, operand 0, single buffered']
    #allocation3 [shape = 's32[1]{0}', space=sflag, size = 0x4, scoped, tag = 'scoped memory for tpu_custom_call.1']
    #allocation4 [shape = 's32[1]{0}', space=sflag, size = 0x4, scoped, tag = 'scoped memory for tpu_custom_call.1']
    #allocation5 [shape = 'u8[512]{0}', space=vmem, size = 0x400, scoped, tag = 'input window, operand 1, single buffered']
    #allocation6 [shape = 's32[1]{0}', space=sflag, size = 0x4, scoped, tag = 'scoped memory for tpu_custom_call.1']
    #allocation7 [shape = 'u8[512]{0}', space=vmem, size = 0x400, scoped, tag = 'output window, operand 0, single buffered']
    #allocation8 [shape = 'u8[512]{0}', space=vmem, size = 0x400, scoped, tag = 'output window, operand 1, single buffered']
    #allocation9 [shape = 's32[1]{0}', space=sflag, size = 0x4, scoped, tag = 'scoped memory for tpu_custom_call.1']
    %9 = vsyncpa [#allocation3], 0
    %10 = vsyncpa [#allocation6], 0
    %11 = vsyncpa [#allocation4], 0
    %12 = vsyncpa [#allocation9], 0
    // Predicated region
    $region2: #{tpu_custom_call.1} parent=1 // pred_check
      _
    $region3: #{tpu_custom_call.1} parent=1 // pred_check_branch
      %14 = sbr.rel (0) target = $region5
    $region4: #{tpu_custom_call.1} parent=1 // pred_region
      %s15 = sadd.s32 0, 0
      %p16 = scmp.lt.s32.totalorder %s15, 0
      %s17 = scalar_select %p16, %s15, 0
      %19 = vsyncadd [#allocation3], 0
      %s20 = smul.addr %s17, 8
      %s21 = scalar_lea.hbm %s0, %s20
      %s23 = sshll.u32 %s21, 4
      %s24 = int_to_ptr.hbm [resolvable:$true] %s23
      %s25 = sshll.u32 [#allocation2], 4
      %s26 = int_to_ptr.vmem [resolvable:$true] %s25
      %28 = dma.hbm_to_vmem [thread:$0]  %s24, 128, %s26, [#allocation3]
    $region5: #{tpu_custom_call.1} parent=1 // pred_fallthru
      _
    // Predicated region
    $region6: #{tpu_custom_call.1} parent=1 // pred_check
      _
    $region7: #{tpu_custom_call.1} parent=1 // pred_check_branch
      %30 = sbr.rel (0) target = $region9
    $region8: #{tpu_custom_call.1} parent=1 // pred_region
      %32 = vsyncadd [#allocation6], 0
      %s34 = sshll.u32 %s1, 4
      %s35 = int_to_ptr.hbm [resolvable:$true] %s34
      %s36 = sshll.u32 [#allocation5], 4
      %s37 = int_to_ptr.vmem [resolvable:$true] %s36
      %39 = dma.hbm_to_vmem [thread:$0]  %s35, 16, %s37, [#allocation6]
    $region9: #{tpu_custom_call.1} parent=1 // pred_fallthru
      _
    // Predicated region
    $region10: #{tpu_custom_call.1} parent=1 // pred_check
      _
    $region11: #{tpu_custom_call.1} parent=1 // pred_check_branch
      %41 = sbr.rel (0) target = $region13
    $region12: #{tpu_custom_call.1} parent=1 // pred_region
      %43 = dma.done [#allocation3], 128
    $region13: #{tpu_custom_call.1} parent=1 // pred_fallthru
      _
    // Predicated region
    $region14: #{tpu_custom_call.1} parent=1 // pred_check
      _
    $region15: #{tpu_custom_call.1} parent=1 // pred_check_branch
      %45 = sbr.rel (0) target = $region17
    $region16: #{tpu_custom_call.1} parent=1 // pred_region
      %47 = dma.done [#allocation6], 16
    $region17: #{tpu_custom_call.1} parent=1 // pred_fallthru
      _
    %s48 = sadd.s32 0, 0
    %p49 = scmp.lt.s32.totalorder %s48, 0
    %s50 = scalar_select %p49, %s48, 0
    %p51 = scmp.eq.s32.totalorder 0, 0
    // Predicated region
    $region18: #{tpu_custom_call.1} parent=1 // pred_check
      %p52 = pneg %p51
    $region19: #{tpu_custom_call.1} parent=1 // pred_check_branch
      %54 = sbr.rel (%p52) target = $region21
    $region20: #{tpu_custom_call.1} parent=1 // pred_region
      %vm55 = vcmask 253952
      %56 = vst.msk [vmem:[#allocation7] sm:$0x1] %vm55, 0.0
      %57 = vst.msk [vmem:[#allocation8] sm:$0x1] %vm55, 0.0
    $region21: #{tpu_custom_call.1} parent=1 // pred_fallthru
      _
    %v58 = vld [vmem:[#allocation2] sm:$0xff]
    %v59 = vld [vmem:[#allocation5] sm:$0x1]
    %v61 = vperm.slane %v59, 0
    %v63 = vsub.f32 %v58, %v61
    %v64 = vld [vmem:[#allocation7] sm:$0x1]
    %vm65 = vcmask 261120
    %v66 = vsel %vm65, %v63, 0.0
    %v67 = vrot.slane %v66, 4
    %v68 = vadd.f32 %v66, %v67
    %v69 = vrot.slane %v68, 2
    %v70 = vadd.f32 %v68, %v69
    %v71 = vrot.slane %v70, 1
    %v72 = vadd.f32 %v70, %v71
    %v73 = vadd.f32 %v64, %v72
    %vm74 = vcmask 253952
    %75 = vst.msk [vmem:[#allocation7] sm:$0x1] %vm74, %v73
    %v76 = vld [vmem:[#allocation8] sm:$0x1]
    %v77 = vmul.f32 %v63, %v63
    %v78 = vsel %vm65, %v77, 0.0
    %v79 = vrot.slane %v78, 4
    %v80 = vadd.f32 %v78, %v79
    %v81 = vrot.slane %v80, 2
    %v82 = vadd.f32 %v80, %v81
    %v83 = vrot.slane %v82, 1
    %v84 = vadd.f32 %v82, %v83
    %v85 = vadd.f32 %v76, %v84
    %86 = vst.msk [vmem:[#allocation8] sm:$0x1] %vm74, %v85
    // Predicated region
    $region22: #{tpu_custom_call.1} parent=1 // pred_check
      _
    $region23: #{tpu_custom_call.1} parent=1 // pred_check_branch
      %88 = sbr.rel (0) target = $region25
    $region24: #{tpu_custom_call.1} parent=1 // pred_region
      %90 = vsyncadd [#allocation4], 0
      %s92 = sshll.u32 [#allocation7], 4
      %s93 = int_to_ptr.vmem [resolvable:$true] %s92
      %s94 = sshll.u32 %s2, 4
      %s95 = int_to_ptr.hbm [resolvable:$true] %s94
      %97 = dma.vmem_to_hbm [thread:$0]  %s93, 16, %s95, [#allocation4]
    $region25: #{tpu_custom_call.1} parent=1 // pred_fallthru
      _
    // Predicated region
    $region26: #{tpu_custom_call.1} parent=1 // pred_check
      _
    $region27: #{tpu_custom_call.1} parent=1 // pred_check_branch
      %99 = sbr.rel (0) target = $region29
    $region28: #{tpu_custom_call.1} parent=1 // pred_region
      %101 = vsyncadd [#allocation9], 0
      %s103 = sshll.u32 [#allocation8], 4
      %s104 = int_to_ptr.vmem [resolvable:$true] %s103
      %s105 = sshll.u32 %s3, 4
      %s106 = int_to_ptr.hbm [resolvable:$true] %s105
      %108 = dma.vmem_to_hbm [thread:$0]  %s104, 16, %s106, [#allocation9]
    $region29: #{tpu_custom_call.1} parent=1 // pred_fallthru
      _
    // Predicated region
    $region30: #{tpu_custom_call.1} parent=1 // pred_check
      _
    $region31: #{tpu_custom_call.1} parent=1 // pred_check_branch
      %110 = sbr.rel (0) target = $region33
    $region32: #{tpu_custom_call.1} parent=1 // pred_region
      %112 = dma.done [#allocation4], 16
    $region33: #{tpu_custom_call.1} parent=1 // pred_fallthru
      _
    // Predicated region
    $region34: #{tpu_custom_call.1} parent=1 // pred_check
      _
    $region35: #{tpu_custom_call.1} parent=1 // pred_check_branch
      %114 = sbr.rel (0) target = $region37
    $region36: #{tpu_custom_call.1} parent=1 // pred_region
      %116 = dma.done [#allocation9], 16
    $region37: #{tpu_custom_call.1} parent=1 // pred_fallthru
      _
    %117 = vsyncpa [#allocation3], 1
    %118 = vsyncpa [#allocation6], 1
    %119 = vsyncpa [#allocation4], 1
    %120 = vsyncpa [#allocation9], 1

</llo_original>
